<compile_context>
chip_gen: v7x
topology: tpu7x:2x2x1
jax: 0.10.0
libtpu: 0.0.40
codegen_flags: <defaults>
</compile_context>

<pallas_src>
import functools

import jax
import jax.numpy as jnp
from jax.experimental import pallas as pl
from jax.experimental.pallas import tpu as pltpu


def _round_up(x, m):
    return (x + m - 1) // m * m


def _fused_kernel(ids_ref, twbd_ref, wa_ref, wb_ref, b1_ref, w2_ref, b2_ref,
                  ts_ref, ind_ref, *, T, K):
    """One tile of tm timesteps: block-diag gather matmul over all tables,
    running max/sum/argmax pooling over K, folded mixer MLP.

    ids_ref : (tm, K*T) i32  event ids, pre-offset by t*V (column = k*T + t)
    twbd_ref: (TVP, HTP) f32 block-diagonal premultiplied (embedding @ W)
    wa_ref  : (HTP, H3P) f32 mixer-1 rows hit by the max-pooled slab
    wb_ref  : (HTP, H3P) f32 mixer-1 rows hit by the sum-pooled slab
                             (mean rows folded in: Wmean/K + Wsum)
    b1_ref  : (1, H3P)   f32 mixer-1 bias with all per-table biases folded in
    w2_ref  : (H3P, P)   f32 mixer-2 weight (hidden dim zero-padded lane-dense)
    b2_ref  : (1, P)     f32 mixer-2 bias
    ts_ref  : (tm, P)    f32 output timestep embeddings (lane-dense)
    ind_ref : (tm, HTP)  i32 argmax event index per (table, hidden) lane
    """
    tm = ids_ref.shape[0]
    TVP, HTP = twbd_ref.shape

    lane_iota = jax.lax.broadcasted_iota(jnp.int32, (tm, TVP), 1)
    twbd = twbd_ref[...]

    def multihot(k):
        # One lane-dense multi-hot row per timestep: a 1 in every table's
        # vocab segment (ids are pre-offset by t*V in the wrapper).
        hit = ids_ref[:, k * T:k * T + 1] == lane_iota
        for t in range(1, T):
            c = k * T + t
            hit = jnp.logical_or(hit, ids_ref[:, c:c + 1] == lane_iota)
        return hit.astype(jnp.float32)

    # k = 0 initializes the running max / sum / argmax; bias is NOT added here
    # (constant over k -> folded into b1'); argmax is unaffected by the bias.
    y = jnp.dot(multihot(0), twbd, preferred_element_type=jnp.float32)
    run_max = y
    run_sum = y
    run_idx = jnp.zeros((tm, HTP), jnp.int32)
    for k in range(1, K):                                    # unrolled
        y = jnp.dot(multihot(k), twbd, preferred_element_type=jnp.float32)
        gt = y > run_max                                     # strict -> first-max tie-break
        run_idx = jnp.where(gt, jnp.int32(k), run_idx)
        run_max = jnp.where(gt, y, run_max)
        run_sum = run_sum + y

    # Mixer: (max|mean|sum pooling, bias, layout permutation) folded into
    # two lane-dense matmuls + b1'; then Linear -> ReLU -> Linear -> ReLU.
    h = jnp.dot(run_max, wa_ref[...], preferred_element_type=jnp.float32)
    h = h + jnp.dot(run_sum, wb_ref[...], preferred_element_type=jnp.float32)
    h = jnp.maximum(h + b1_ref[...], 0.0)
    out = jnp.dot(h, w2_ref[...], preferred_element_type=jnp.float32) + b2_ref[...]

    ts_ref[...] = jnp.maximum(out, 0.0).astype(ts_ref.dtype)
    ind_ref[...] = run_idx


@functools.partial(jax.jit, static_argnames=("tm", "T", "K"))
def _deep_timestep_forward(ids, twbd, wa, wb, b1, w2, b2, *, tm, T, K):
    """ids: (M, K*T) i32 (pre-offset); twbd/wa/wb/b1/w2/b2: lane-dense f32."""
    M = ids.shape[0]
    TVP, HTP = twbd.shape
    P = w2.shape[1]

    # Tile size: multiple of 8; capped so the grid has >= 2 steps when M
    # allows (lets the "parallel" axis split across both v7x TensorCores).
    tm_eff = max(8, min(tm, _round_up((M + 1) // 2, 8)))
    m_pad = _round_up(M, tm_eff)
    if m_pad != M:
        ids = jnp.pad(ids, ((0, m_pad - M), (0, 0)))

    kernel = functools.partial(_fused_kernel, T=T, K=K)
    ts, ind = pl.pallas_call(
        kernel,
        out_shape=(
            jax.ShapeDtypeStruct((m_pad, P), jnp.float32),
            jax.ShapeDtypeStruct((m_pad, HTP), jnp.int32),
        ),
        grid_spec=pltpu.PrefetchScalarGridSpec(
            num_scalar_prefetch=0,
            grid=(m_pad // tm_eff,),
            in_specs=[
                pl.BlockSpec((tm_eff, K * T), lambda i: (i, 0)),  # ids (tiled)
                pl.BlockSpec((TVP, HTP), lambda i: (0, 0)),       # resident
                pl.BlockSpec(wa.shape, lambda i: (0, 0)),         # resident
                pl.BlockSpec(wb.shape, lambda i: (0, 0)),         # resident
                pl.BlockSpec(b1.shape, lambda i: (0, 0)),         # resident
                pl.BlockSpec(w2.shape, lambda i: (0, 0)),         # resident
                pl.BlockSpec(b2.shape, lambda i: (0, 0)),         # resident
            ],
            out_specs=[
                pl.BlockSpec((tm_eff, P), lambda i: (i, 0)),
                pl.BlockSpec((tm_eff, HTP), lambda i: (i, 0)),
            ],
        ),
        compiler_params=pltpu.CompilerParams(
            dimension_semantics=("parallel",),
        ),
    )(ids, twbd, wa, wb, b1, w2, b2)
    return ts[:M], ind[:M]


def deep_timestep_encoder(inputs, table_params, mixer_params, table_names,
                          *, tm=1024):
    """Forward equivalent of DeepTimestepEncoder.forward.

    inputs       : list of (N, L, K) int32 event-id tensors (one per table)
    table_params : list of dicts with 'embedding' (V,E), 'w' (E,H), 'b' (1,1,H)
    mixer_params : dict with 'w1' (T*3H,3H), 'b1' (3H,), 'w2' (3H,P), 'b2' (P,)
    returns      : (timesteps (N,L,P), {'measure_inds': {table: (N*L, H)}})
    """
    T = len(inputs)
    N, L, K = inputs[0].shape
    M = N * L
    V = table_params[0]["embedding"].shape[0]
    H = table_params[0]["w"].shape[1]
    P = mixer_params["w2"].shape[1]

    TVP = _round_up(T * V, 128)          # lane-dense multi-hot width
    HTP = _round_up(T * H, 128)          # lane-dense pooled width
    H3 = 3 * H
    H3P = _round_up(H3, 128)             # lane-dense mixer hidden width

    # ids packed as one (M, K*T) int32 array, column k*T + t, pre-offset by
    # t*V so a single multi-hot row per k addresses every table's block.
    ids = jnp.stack(
        [x.reshape(M, K).astype(jnp.int32) + t * V
         for t, x in enumerate(inputs)], axis=2).reshape(M, K * T)

    # Block-diagonal premultiplied tables:
    # (embedding[ids] @ W) == (embedding @ W)[ids]
    twbd = jnp.zeros((TVP, HTP), jnp.float32)
    for t, p in enumerate(table_params):
        twbd = twbd.at[t * V:(t + 1) * V, t * H:(t + 1) * H].set(
            (p["embedding"] @ p["w"]).astype(jnp.float32))

    b_flat = jnp.concatenate(
        [p["b"].reshape(-1) for p in table_params], 0).astype(jnp.float32)

    # Permute mixer-1 rows from the reference pooled layout
    # [max_t|mean_t|sum_t]xT to the fused [max_t0..tT | sum_t0..tT] layout and
    # fold: mean = sum/K into the sum rows, per-table bias into the bias.
    w1 = mixer_params["w1"]                                     # (T*3H, 3H)
    w_max = jnp.concatenate([w1[t * H3:t * H3 + H] for t in range(T)], 0)
    w_mean = jnp.concatenate([w1[t * H3 + H:t * H3 + 2 * H] for t in range(T)], 0)
    w_sum = jnp.concatenate([w1[t * H3 + 2 * H:t * H3 + 3 * H] for t in range(T)], 0)
    wa = w_max                                                  # x running max
    wb = w_mean / K + w_sum                                     # x running sum
    b1_fold = mixer_params["b1"].reshape(-1) + b_flat @ (w_max + w_mean + K * w_sum)

    # Zero-pad everything lane-dense (exact: zero rows/cols contribute nothing,
    # ReLU(0) = 0, zero w2 rows kill the padded hidden lanes).
    wa_p = jnp.zeros((HTP, H3P), jnp.float32).at[:T * H, :H3].set(wa)
    wb_p = jnp.zeros((HTP, H3P), jnp.float32).at[:T * H, :H3].set(wb)
    b1_p = jnp.zeros((1, H3P), jnp.float32).at[0, :H3].set(b1_fold)
    w2_p = jnp.zeros((H3P, P), jnp.float32).at[:H3, :].set(mixer_params["w2"])
    b2 = mixer_params["b2"].reshape(1, P).astype(jnp.float32)

    ts, ind = _deep_timestep_forward(ids, twbd, wa_p, wb_p, b1_p, w2_p, b2,
                                     tm=tm, T=T, K=K)

    measure_inds = {
        name: ind[:, t * H:(t + 1) * H] for t, name in enumerate(table_names)
    }
    timesteps = ts.reshape(N, L, P)
    return timesteps, {"measure_inds": measure_inds}


if __name__ == "__main__":
    # Small deterministic setup consistent with the module's forward.
    N, L, K = 2, 8, 4            # batch, seq len, events per timestep
    VOCAB, E, H = 32, 32, 32     # joint vocab, event embed dim, hidden_size
    P = 128                      # pat_hidden_size
    table_names = ["labs", "meds"]
    T = len(table_names)

    key = jax.random.PRNGKey(0)
    k_ids, k_tab, k_mix = jax.random.split(key, 3)

    table_params = []
    tkeys = jax.random.split(k_tab, 3 * T)
    for t in range(T):
        ke, kw, kb = tkeys[3 * t:3 * t + 3]
        table_params.append({
            "embedding": jax.random.normal(ke, (VOCAB, E), jnp.float32) * 0.1,
            "w": jax.random.normal(kw, (E, H), jnp.float32) * 0.1,
            "b": jax.random.normal(kb, (1, 1, H), jnp.float32) * 0.1,
        })

    mkeys = jax.random.split(k_mix, 4)
    mixer_params = {
        "w1": jax.random.normal(mkeys[0], (T * 3 * H, 3 * H), jnp.float32) * 0.1,
        "b1": jax.random.normal(mkeys[1], (3 * H,), jnp.float32) * 0.1,
        "w2": jax.random.normal(mkeys[2], (3 * H, P), jnp.float32) * 0.1,
        "b2": jax.random.normal(mkeys[3], (P,), jnp.float32) * 0.1,
    }

    inputs = [
        jax.random.randint(jax.random.fold_in(k_ids, t), (N, L, K), 0, VOCAB,
                           dtype=jnp.int32)
        for t in range(T)
    ]

    timesteps, extras = deep_timestep_encoder(
        inputs, table_params, mixer_params, table_names)
    jax.block_until_ready(timesteps)
    for v in extras["measure_inds"].values():
        jax.block_until_ready(v)

    # Pure-JAX reference of the full module forward.
    M = N * L
    pooled_ref = []
    y_per_table = []
    for inp, p in zip(inputs, table_params):
        emb = jnp.take(p["embedding"], inp.reshape(-1, K), axis=0)   # (M,K,E)
        y = jnp.einsum("mke,eh->mkh", emb, p["w"]) + p["b"]          # (M,K,H)
        y_per_table.append(y)
        pooled_ref.append(
            jnp.concatenate([y.max(axis=1), y.mean(axis=1), y.sum(axis=1)], -1))
    cat = jnp.concatenate(pooled_ref, axis=-1)                       # (M, T*3H)
    h_ref = jnp.maximum(cat @ mixer_params["w1"] + mixer_params["b1"], 0.0)
    ts_ref = jnp.maximum(h_ref @ mixer_params["w2"] + mixer_params["b2"],
                         0.0).reshape(N, L, P)

    assert timesteps.shape == (N, L, P)
    err = float(jnp.max(jnp.abs(timesteps - ts_ref)))
    assert jnp.allclose(timesteps, ts_ref, atol=1e-4, rtol=1e-4), err

    # measure_ind check: indices must point at (a) maximum of y along K.
    for name, y in zip(table_names, y_per_table):
        ind = extras["measure_inds"][name]
        assert ind.shape == (M, H) and ind.dtype == jnp.int32
        picked = jnp.take_along_axis(y, ind[:, None, :], axis=1)[:, 0, :]
        assert jnp.allclose(picked, y.max(axis=1), atol=1e-5, rtol=1e-5)

    print("KERNEL_OK")
</pallas_src>

<mosaic_0001>
module attributes {stable_mosaic.version = 11 : i64} {
  func.func @_fused_kernel(%arg0: i32, %arg1: memref<8x8xi32, #tpu.memory_space<vmem>>, %arg2: memref<128x128xf32, #tpu.memory_space<vmem>>, %arg3: memref<128x128xf32, #tpu.memory_space<vmem>>, %arg4: memref<128x128xf32, #tpu.memory_space<vmem>>, %arg5: memref<1x128xf32, #tpu.memory_space<vmem>>, %arg6: memref<128x128xf32, #tpu.memory_space<vmem>>, %arg7: memref<1x128xf32, #tpu.memory_space<vmem>>, %arg8: memref<8x128xf32, #tpu.memory_space<vmem>>, %arg9: memref<8x128xi32, #tpu.memory_space<vmem>>) attributes {dimension_semantics = [#tpu.dimension_semantics<parallel>], iteration_bounds = array<i64: 2>, scalar_prefetch = 0 : i64, scratch_operands = 0 : i64, tpu.core_type = #tpu.core_type<tc>, window_params = [{transform_indices = @transform_0, window_bounds = array<i64: 8, 8>}, {pipeline_mode = #tpu.pipeline_mode<synchronous>, transform_indices = @transform_1, window_bounds = array<i64: 128, 128>}, {pipeline_mode = #tpu.pipeline_mode<synchronous>, transform_indices = @transform_2, window_bounds = array<i64: 128, 128>}, {pipeline_mode = #tpu.pipeline_mode<synchronous>, transform_indices = @transform_3, window_bounds = array<i64: 128, 128>}, {pipeline_mode = #tpu.pipeline_mode<synchronous>, transform_indices = @transform_4, window_bounds = array<i64: 1, 128>}, {pipeline_mode = #tpu.pipeline_mode<synchronous>, transform_indices = @transform_5, window_bounds = array<i64: 128, 128>}, {pipeline_mode = #tpu.pipeline_mode<synchronous>, transform_indices = @transform_6, window_bounds = array<i64: 1, 128>}, {transform_indices = @transform_7, window_bounds = array<i64: 8, 128>}, {transform_indices = @transform_8, window_bounds = array<i64: 8, 128>}]} {
    %0 = tpu.iota {dimensions = array<i32: 1>} : vector<8x128xi32>
    %c0 = arith.constant 0 : index
    %c0_0 = arith.constant 0 : index
    %1 = vector.load %arg2[%c0, %c0_0] : memref<128x128xf32, #tpu.memory_space<vmem>>, vector<128x128xf32>
    %c0_1 = arith.constant 0 : index
    %c0_2 = arith.constant 0 : index
    %2 = vector.load %arg1[%c0_1, %c0_2] : memref<8x8xi32, #tpu.memory_space<vmem>>, vector<8x1xi32>
    %3 = vector.broadcast %2 : vector<8x1xi32> to vector<8x128xi32>
    %4 = arith.cmpi eq, %3, %0 : vector<8x128xi32>
    %c0_3 = arith.constant 0 : index
    %c1 = arith.constant 1 : index
    %5 = vector.load %arg1[%c0_3, %c1] : memref<8x8xi32, #tpu.memory_space<vmem>>, vector<8x1xi32>
    %6 = vector.broadcast %5 : vector<8x1xi32> to vector<8x128xi32>
    %7 = arith.cmpi eq, %6, %0 : vector<8x128xi32>
    %8 = arith.ori %4, %7 : vector<8x128xi1>
    %9 = arith.extui %8 : vector<8x128xi1> to vector<8x128xi32>
    %10 = arith.sitofp %9 : vector<8x128xi32> to vector<8x128xf32>
    %cst = arith.constant dense<0.000000e+00> : vector<8x128xf32>
    %11 = tpu.matmul %10, %1, %cst {dimension_numbers = #tpu.dot_dimension_numbers<[1], [0], [0], [1], [0, 0, 1, 1], [], []>} : vector<8x128xf32>, vector<128x128xf32>, vector<8x128xf32> -> vector<8x128xf32>
    %c0_i32 = arith.constant 0 : i32
    %12 = vector.broadcast %c0_i32 : i32 to vector<8x128xi32>
    %c0_4 = arith.constant 0 : index
    %c2 = arith.constant 2 : index
    %13 = vector.load %arg1[%c0_4, %c2] : memref<8x8xi32, #tpu.memory_space<vmem>>, vector<8x1xi32>
    %14 = vector.broadcast %13 : vector<8x1xi32> to vector<8x128xi32>
    %15 = arith.cmpi eq, %14, %0 : vector<8x128xi32>
    %c0_5 = arith.constant 0 : index
    %c3 = arith.constant 3 : index
    %16 = vector.load %arg1[%c0_5, %c3] : memref<8x8xi32, #tpu.memory_space<vmem>>, vector<8x1xi32>
    %17 = vector.broadcast %16 : vector<8x1xi32> to vector<8x128xi32>
    %18 = arith.cmpi eq, %17, %0 : vector<8x128xi32>
    %19 = arith.ori %15, %18 : vector<8x128xi1>
    %20 = arith.extui %19 : vector<8x128xi1> to vector<8x128xi32>
    %21 = arith.sitofp %20 : vector<8x128xi32> to vector<8x128xf32>
    %cst_6 = arith.constant dense<0.000000e+00> : vector<8x128xf32>
    %22 = tpu.matmul %21, %1, %cst_6 {dimension_numbers = #tpu.dot_dimension_numbers<[1], [0], [0], [1], [0, 0, 1, 1], [], []>} : vector<8x128xf32>, vector<128x128xf32>, vector<8x128xf32> -> vector<8x128xf32>
    %23 = arith.cmpf ogt, %22, %11 : vector<8x128xf32>
    %c1_i32 = arith.constant 1 : i32
    %24 = vector.broadcast %c1_i32 : i32 to vector<8x128xi32>
    %25 = arith.select %23, %24, %12 : vector<8x128xi1>, vector<8x128xi32>
    %26 = arith.select %23, %22, %11 : vector<8x128xi1>, vector<8x128xf32>
    %27 = arith.addf %11, %22 : vector<8x128xf32>
    %c0_7 = arith.constant 0 : index
    %c4 = arith.constant 4 : index
    %28 = vector.load %arg1[%c0_7, %c4] : memref<8x8xi32, #tpu.memory_space<vmem>>, vector<8x1xi32>
    %29 = vector.broadcast %28 : vector<8x1xi32> to vector<8x128xi32>
    %30 = arith.cmpi eq, %29, %0 : vector<8x128xi32>
    %c0_8 = arith.constant 0 : index
    %c5 = arith.constant 5 : index
    %31 = vector.load %arg1[%c0_8, %c5] : memref<8x8xi32, #tpu.memory_space<vmem>>, vector<8x1xi32>
    %32 = vector.broadcast %31 : vector<8x1xi32> to vector<8x128xi32>
    %33 = arith.cmpi eq, %32, %0 : vector<8x128xi32>
    %34 = arith.ori %30, %33 : vector<8x128xi1>
    %35 = arith.extui %34 : vector<8x128xi1> to vector<8x128xi32>
    %36 = arith.sitofp %35 : vector<8x128xi32> to vector<8x128xf32>
    %cst_9 = arith.constant dense<0.000000e+00> : vector<8x128xf32>
    %37 = tpu.matmul %36, %1, %cst_9 {dimension_numbers = #tpu.dot_dimension_numbers<[1], [0], [0], [1], [0, 0, 1, 1], [], []>} : vector<8x128xf32>, vector<128x128xf32>, vector<8x128xf32> -> vector<8x128xf32>
    %38 = arith.cmpf ogt, %37, %26 : vector<8x128xf32>
    %c2_i32 = arith.constant 2 : i32
    %39 = vector.broadcast %c2_i32 : i32 to vector<8x128xi32>
    %40 = arith.select %38, %39, %25 : vector<8x128xi1>, vector<8x128xi32>
    %41 = arith.select %38, %37, %26 : vector<8x128xi1>, vector<8x128xf32>
    %42 = arith.addf %27, %37 : vector<8x128xf32>
    %c0_10 = arith.constant 0 : index
    %c6 = arith.constant 6 : index
    %43 = vector.load %arg1[%c0_10, %c6] : memref<8x8xi32, #tpu.memory_space<vmem>>, vector<8x1xi32>
    %44 = vector.broadcast %43 : vector<8x1xi32> to vector<8x128xi32>
    %45 = arith.cmpi eq, %44, %0 : vector<8x128xi32>
    %c0_11 = arith.constant 0 : index
    %c7 = arith.constant 7 : index
    %46 = vector.load %arg1[%c0_11, %c7] : memref<8x8xi32, #tpu.memory_space<vmem>>, vector<8x1xi32>
    %47 = vector.broadcast %46 : vector<8x1xi32> to vector<8x128xi32>
    %48 = arith.cmpi eq, %47, %0 : vector<8x128xi32>
    %49 = arith.ori %45, %48 : vector<8x128xi1>
    %50 = arith.extui %49 : vector<8x128xi1> to vector<8x128xi32>
    %51 = arith.sitofp %50 : vector<8x128xi32> to vector<8x128xf32>
    %cst_12 = arith.constant dense<0.000000e+00> : vector<8x128xf32>
    %52 = tpu.matmul %51, %1, %cst_12 {dimension_numbers = #tpu.dot_dimension_numbers<[1], [0], [0], [1], [0, 0, 1, 1], [], []>} : vector<8x128xf32>, vector<128x128xf32>, vector<8x128xf32> -> vector<8x128xf32>
    %53 = arith.cmpf ogt, %52, %41 : vector<8x128xf32>
    %c3_i32 = arith.constant 3 : i32
    %54 = vector.broadcast %c3_i32 : i32 to vector<8x128xi32>
    %55 = arith.select %53, %54, %40 : vector<8x128xi1>, vector<8x128xi32>
    %56 = arith.select %53, %52, %41 : vector<8x128xi1>, vector<8x128xf32>
    %57 = arith.addf %42, %52 : vector<8x128xf32>
    %c0_13 = arith.constant 0 : index
    %c0_14 = arith.constant 0 : index
    %58 = vector.load %arg3[%c0_13, %c0_14] : memref<128x128xf32, #tpu.memory_space<vmem>>, vector<128x128xf32>
    %cst_15 = arith.constant dense<0.000000e+00> : vector<8x128xf32>
    %59 = tpu.matmul %56, %58, %cst_15 {dimension_numbers = #tpu.dot_dimension_numbers<[1], [0], [0], [1], [0, 0, 1, 1], [], []>} : vector<8x128xf32>, vector<128x128xf32>, vector<8x128xf32> -> vector<8x128xf32>
    %c0_16 = arith.constant 0 : index
    %c0_17 = arith.constant 0 : index
    %60 = vector.load %arg4[%c0_16, %c0_17] : memref<128x128xf32, #tpu.memory_space<vmem>>, vector<128x128xf32>
    %cst_18 = arith.constant dense<0.000000e+00> : vector<8x128xf32>
    %61 = tpu.matmul %57, %60, %cst_18 {dimension_numbers = #tpu.dot_dimension_numbers<[1], [0], [0], [1], [0, 0, 1, 1], [], []>} : vector<8x128xf32>, vector<128x128xf32>, vector<8x128xf32> -> vector<8x128xf32>
    %62 = arith.addf %59, %61 : vector<8x128xf32>
    %c0_19 = arith.constant 0 : index
    %c0_20 = arith.constant 0 : index
    %63 = vector.load %arg5[%c0_19, %c0_20] : memref<1x128xf32, #tpu.memory_space<vmem>>, vector<1x128xf32>
    %64 = vector.broadcast %63 : vector<1x128xf32> to vector<8x128xf32>
    %65 = arith.addf %62, %64 : vector<8x128xf32>
    %cst_21 = arith.constant 0.000000e+00 : f32
    %66 = vector.broadcast %cst_21 : f32 to vector<8x128xf32>
    %67 = arith.maximumf %65, %66 : vector<8x128xf32>
    %c0_22 = arith.constant 0 : index
    %c0_23 = arith.constant 0 : index
    %68 = vector.load %arg6[%c0_22, %c0_23] : memref<128x128xf32, #tpu.memory_space<vmem>>, vector<128x128xf32>
    %cst_24 = arith.constant dense<0.000000e+00> : vector<8x128xf32>
    %69 = tpu.matmul %67, %68, %cst_24 {dimension_numbers = #tpu.dot_dimension_numbers<[1], [0], [0], [1], [0, 0, 1, 1], [], []>} : vector<8x128xf32>, vector<128x128xf32>, vector<8x128xf32> -> vector<8x128xf32>
    %c0_25 = arith.constant 0 : index
    %c0_26 = arith.constant 0 : index
    %70 = vector.load %arg7[%c0_25, %c0_26] : memref<1x128xf32, #tpu.memory_space<vmem>>, vector<1x128xf32>
    %71 = vector.broadcast %70 : vector<1x128xf32> to vector<8x128xf32>
    %72 = arith.addf %69, %71 : vector<8x128xf32>
    %cst_27 = arith.constant 0.000000e+00 : f32
    %73 = vector.broadcast %cst_27 : f32 to vector<8x128xf32>
    %74 = arith.maximumf %72, %73 : vector<8x128xf32>
    %c0_28 = arith.constant 0 : index
    %c0_29 = arith.constant 0 : index
    %75 = vector.load %arg8[%c0_28, %c0_29] : memref<8x128xf32, #tpu.memory_space<vmem>>, vector<8x128xf32>
    tpu.vector_store %arg8[%c0_28, %c0_29], %74 {strides = array<i32>} : memref<8x128xf32, #tpu.memory_space<vmem>>, vector<8x128xf32>,
    %c0_30 = arith.constant 0 : index
    %c0_31 = arith.constant 0 : index
    %76 = vector.load %arg9[%c0_30, %c0_31] : memref<8x128xi32, #tpu.memory_space<vmem>>, vector<8x128xi32>
    tpu.vector_store %arg9[%c0_30, %c0_31], %55 {strides = array<i32>} : memref<8x128xi32, #tpu.memory_space<vmem>>, vector<8x128xi32>,
    return
  }
  func.func @transform_0(%arg0: i32) -> (i32, i32) {
    %c0_i32 = arith.constant 0 : i32
    %c0_i32_0 = arith.constant 0 : i32
    return %arg0, %c0_i32 : i32, i32
  }
  func.func @transform_1(%arg0: i32) -> (i32, i32) {
    %c0_i32 = arith.constant 0 : i32
    %c0_i32_0 = arith.constant 0 : i32
    %c0_i32_1 = arith.constant 0 : i32
    return %c0_i32, %c0_i32_0 : i32, i32
  }
  func.func @transform_2(%arg0: i32) -> (i32, i32) {
    %c0_i32 = arith.constant 0 : i32
    %c0_i32_0 = arith.constant 0 : i32
    %c0_i32_1 = arith.constant 0 : i32
    return %c0_i32, %c0_i32_0 : i32, i32
  }
  func.func @transform_3(%arg0: i32) -> (i32, i32) {
    %c0_i32 = arith.constant 0 : i32
    %c0_i32_0 = arith.constant 0 : i32
    %c0_i32_1 = arith.constant 0 : i32
    return %c0_i32, %c0_i32_0 : i32, i32
  }
  func.func @transform_4(%arg0: i32) -> (i32, i32) {
    %c0_i32 = arith.constant 0 : i32
    %c0_i32_0 = arith.constant 0 : i32
    %c0_i32_1 = arith.constant 0 : i32
    return %c0_i32, %c0_i32_0 : i32, i32
  }
  func.func @transform_5(%arg0: i32) -> (i32, i32) {
    %c0_i32 = arith.constant 0 : i32
    %c0_i32_0 = arith.constant 0 : i32
    %c0_i32_1 = arith.constant 0 : i32
    return %c0_i32, %c0_i32_0 : i32, i32
  }
  func.func @transform_6(%arg0: i32) -> (i32, i32) {
    %c0_i32 = arith.constant 0 : i32
    %c0_i32_0 = arith.constant 0 : i32
    %c0_i32_1 = arith.constant 0 : i32
    return %c0_i32, %c0_i32_0 : i32, i32
  }
  func.func @transform_7(%arg0: i32) -> (i32, i32) {
    %c0_i32 = arith.constant 0 : i32
    %c0_i32_0 = arith.constant 0 : i32
    return %arg0, %c0_i32 : i32, i32
  }
  func.func @transform_8(%arg0: i32) -> (i32, i32) {
    %c0_i32 = arith.constant 0 : i32
    %c0_i32_0 = arith.constant 0 : i32
    return %arg0, %c0_i32 : i32, i32
  }
}

</mosaic_0001>

<llo_original>
// kernel: _deep_timestep_forward.1
$region0: #{_deep_timestep_forward.1}
  #allocation0 [shape = 'u32[]', space=smem, size = 0x4, offset = 0x4, fixed_abs, tag = 'smem constant byte address 0x4 - core index']
  #allocation1 [shape = 'u32[144,128]{1,0:T(1,128)}', space=vmem, size = 0x12000, scoped, tag = 'internal scratch']
  %s0 = inlined_call_operand.vmem [shape: s32[16,8], index: 0, kind: input, shape index: {}]
  %s1 = inlined_call_operand.hbm [shape: f32[128,128], index: 1, kind: input, shape index: {}]
  %s2 = inlined_call_operand.hbm [shape: f32[128,128], index: 2, kind: input, shape index: {}]
  %s3 = inlined_call_operand.hbm [shape: f32[128,128], index: 3, kind: input, shape index: {}]
  %s4 = inlined_call_operand.vmem [shape: f32[1,128], index: 4, kind: input, shape index: {}]
  %s5 = inlined_call_operand.hbm [shape: f32[128,128], index: 5, kind: input, shape index: {}]
  %s6 = inlined_call_operand.vmem [shape: f32[1,128], index: 6, kind: input, shape index: {}]
  %s7 = inlined_call_operand.hbm [shape: f32[16,128], index: 7, kind: output, shape index: {0}]
  %s8 = inlined_call_operand.hbm [shape: s32[16,128], index: 8, kind: output, shape index: {1}]
  %9 = xla_tuple %s7, %s8
  %s10 = sld [smem:[#allocation0]]
  $region85: #{_deep_timestep_forward.1} parent=0
    _
  %s12 = ssub.s32 1, %s10
  %s13 = scalar_select 0, %s12, %s10
  $region1: #{_deep_timestep_forward.1} parent=0
    #allocation2 [shape = 'u8[65536]{0}', space=vmem, size = 0x10000, scoped, tag = 'input window, operand 1, single buffered']
    #allocation3 [shape = 's32[2]{0}', space=sflag, size = 0x8, scoped, tag = 'scoped memory for _deep_timestep_forward.1']
    #allocation4 [shape = 's32[2]{0}', space=sflag, size = 0x8, scoped, tag = 'scoped memory for _deep_timestep_forward.1']
    #allocation5 [shape = 'u8[65536]{0}', space=vmem, size = 0x10000, scoped, tag = 'input window, operand 2, single buffered']
    #allocation6 [shape = 's32[1]{0}', space=sflag, size = 0x4, scoped, tag = 'scoped memory for _deep_timestep_forward.1']
    #allocation7 [shape = 'u8[65536]{0}', space=vmem, size = 0x10000, scoped, tag = 'input window, operand 3, single buffered']
    #allocation8 [shape = 'u8[65536]{0}', space=vmem, size = 0x10000, scoped, tag = 'input window, operand 5, single buffered']
    #allocation9 [shape = 's32[1]{0}', space=sflag, size = 0x4, scoped, tag = 'scoped memory for _deep_timestep_forward.1']
    #allocation10 [shape = 'u8[8192]{0}', space=vmem, size = 0x2000, scoped, tag = 'output window, operand 0']
    #allocation11 [shape = 'u8[8192]{0}', space=vmem, size = 0x2000, scoped, tag = 'output window, operand 1']
    #allocation12 [shape = 's32[2]{0}', space=sflag, size = 0x8, scoped, tag = 'scoped memory for _deep_timestep_forward.1']
    %14 = vsyncpa [#allocation3], 0
    %15 = vsyncpa [#allocation6], 0
    %16 = vsyncpa [#allocation9], 0
    %17 = vsyncpa [#allocation4], 0
    %s18 = scalar_lea.sflag [#allocation4], 1
    %19 = vsyncpa %s18, 0
    %20 = vsyncpa [#allocation12], 0
    %s21 = scalar_lea.sflag [#allocation12], 1
    %22 = vsyncpa %s21, 0
    loop: start=0, step=1, limit=4
    $region2: #{_deep_timestep_forward.1} parent=1 // loop_pre_header
      _
    $region3: #{_deep_timestep_forward.1} parent=1 // loop_header
      %s24 = sphi 0, %s28
      %p25 = scmp.ge.s32.totalorder %s24, 4
      %s34 = sphi 0, %s36
      %s37 = sphi 0, %s34
      %s38 = sphi 0, %s37
      %s54 = sphi 0, %s38
      %s58 = sphi 0, %s58
      %s60 = sphi 0, %s58
      %s61 = sphi 0, %s60
      %s75 = sphi 0, %s61
      %s79 = sphi 0, %s79
      %s81 = sphi 0, %s79
      %s82 = sphi 0, %s81
      %s96 = sphi 0, %s82
      %s100 = sphi 0, %s100
      %s102 = sphi 0, %s100
      %s103 = sphi 0, %s102
      %s117 = sphi 0, %s103
      %s121 = sphi 0, %s121
      %s123 = sphi 0, %s121
      %s124 = sphi 0, %s123
      %s138 = sphi 0, %s124
      %s142 = sphi 0, %s142
      %s144 = sphi 0, %s142
      %s145 = sphi 0, %s144
      %s159 = sphi 0, %s145
      %s163 = sphi 0, %s163
      %s165 = sphi 0, %s163
      %s166 = sphi 0, %s165
      %s180 = sphi 0, %s166
      %s186 = sphi 0, %s188
      %s189 = sphi 0, %s186
      %s190 = sphi 0, %s189
      %s206 = sphi 0, %s190
      %s212 = sphi 0, %s214
      %s215 = sphi 0, %s212
      %s216 = sphi 0, %s215
      %s232 = sphi 0, %s216
    $region4: #{_deep_timestep_forward.1} parent=1 // loop_header_branch
      %27 = sbr.rel (%p25) target = $region8
    $region5: #{_deep_timestep_forward.1} parent=1 // loop_body
      %s29 = ssub.s32 %s24, 1
      %s30 = ssub.s32 %s24, 2
      %s31 = sadd.s32 %s24, 1
      %s32 = ssub.s32 %s24, %s31
      %p33 = scmp.eq.s32.totalorder %s32, 0
      %s35 = sadd.s32 %s34, 1
      %s36 = scalar_select %p33, %s34, %s35
      %p39 = pneg %p33
      %p40 = scmp.eq.s32.totalorder %s24, 1
      %p41 = por %p39, %p40
      %p42 = scmp.ne.s32.totalorder %s34, %s37
      %p43 = scmp.eq.s32.totalorder %s24, 0
      %p44 = por %p42, %p43
      %p45 = scmp.ne.s32.totalorder %s34, %s37
      %p46 = scmp.eq.s32.totalorder %s29, 1
      %p47 = por %p45, %p46
      %p48 = scmp.ne.s32.totalorder %s37, %s38
      %p49 = scmp.eq.s32.totalorder %s29, 0
      %p50 = por %p48, %p49
      %p51 = scmp.ne.s32.totalorder %s37, %s38
      %p52 = scmp.eq.s32.totalorder %s30, 1
      %p53 = por %p51, %p52
      %p55 = scmp.ne.s32.totalorder %s38, %s54
      %p56 = scmp.eq.s32.totalorder %s30, 0
      %p57 = por %p55, %p56
      %s59 = sadd.s32 %s58, 1
      %p62 = scmp.eq.s32.totalorder %s24, 1
      %p63 = scmp.ne.s32.totalorder %s58, %s60
      %p64 = scmp.eq.s32.totalorder %s24, 0
      %p65 = por %p63, %p64
      %p66 = scmp.ne.s32.totalorder %s58, %s60
      %p67 = scmp.eq.s32.totalorder %s29, 1
      %p68 = por %p66, %p67
      %p69 = scmp.ne.s32.totalorder %s60, %s61
      %p70 = scmp.eq.s32.totalorder %s29, 0
      %p71 = por %p69, %p70
      %p72 = scmp.ne.s32.totalorder %s60, %s61
      %p73 = scmp.eq.s32.totalorder %s30, 1
      %p74 = por %p72, %p73
      %p76 = scmp.ne.s32.totalorder %s61, %s75
      %p77 = scmp.eq.s32.totalorder %s30, 0
      %p78 = por %p76, %p77
      %s80 = sadd.s32 %s79, 1
      %p83 = scmp.eq.s32.totalorder %s24, 1
      %p84 = scmp.ne.s32.totalorder %s79, %s81
      %p85 = scmp.eq.s32.totalorder %s24, 0
      %p86 = por %p84, %p85
      %p87 = scmp.ne.s32.totalorder %s79, %s81
      %p88 = scmp.eq.s32.totalorder %s29, 1
      %p89 = por %p87, %p88
      %p90 = scmp.ne.s32.totalorder %s81, %s82
      %p91 = scmp.eq.s32.totalorder %s29, 0
      %p92 = por %p90, %p91
      %p93 = scmp.ne.s32.totalorder %s81, %s82
      %p94 = scmp.eq.s32.totalorder %s30, 1
      %p95 = por %p93, %p94
      %p97 = scmp.ne.s32.totalorder %s82, %s96
      %p98 = scmp.eq.s32.totalorder %s30, 0
      %p99 = por %p97, %p98
      %s101 = sadd.s32 %s100, 1
      %p104 = scmp.eq.s32.totalorder %s24, 1
      %p105 = scmp.ne.s32.totalorder %s100, %s102
      %p106 = scmp.eq.s32.totalorder %s24, 0
      %p107 = por %p105, %p106
      %p108 = scmp.ne.s32.totalorder %s100, %s102
      %p109 = scmp.eq.s32.totalorder %s29, 1
      %p110 = por %p108, %p109
      %p111 = scmp.ne.s32.totalorder %s102, %s103
      %p112 = scmp.eq.s32.totalorder %s29, 0
      %p113 = por %p111, %p112
      %p114 = scmp.ne.s32.totalorder %s102, %s103
      %p115 = scmp.eq.s32.totalorder %s30, 1
      %p116 = por %p114, %p115
      %p118 = scmp.ne.s32.totalorder %s103, %s117
      %p119 = scmp.eq.s32.totalorder %s30, 0
      %p120 = por %p118, %p119
      %s122 = sadd.s32 %s121, 1
      %p125 = scmp.eq.s32.totalorder %s24, 1
      %p126 = scmp.ne.s32.totalorder %s121, %s123
      %p127 = scmp.eq.s32.totalorder %s24, 0
      %p128 = por %p126, %p127
      %p129 = scmp.ne.s32.totalorder %s121, %s123
      %p130 = scmp.eq.s32.totalorder %s29, 1
      %p131 = por %p129, %p130
      %p132 = scmp.ne.s32.totalorder %s123, %s124
      %p133 = scmp.eq.s32.totalorder %s29, 0
      %p134 = por %p132, %p133
      %p135 = scmp.ne.s32.totalorder %s123, %s124
      %p136 = scmp.eq.s32.totalorder %s30, 1
      %p137 = por %p135, %p136
      %p139 = scmp.ne.s32.totalorder %s124, %s138
      %p140 = scmp.eq.s32.totalorder %s30, 0
      %p141 = por %p139, %p140
      %s143 = sadd.s32 %s142, 1
      %p146 = scmp.eq.s32.totalorder %s24, 1
      %p147 = scmp.ne.s32.totalorder %s142, %s144
      %p148 = scmp.eq.s32.totalorder %s24, 0
      %p149 = por %p147, %p148
      %p150 = scmp.ne.s32.totalorder %s142, %s144
      %p151 = scmp.eq.s32.totalorder %s29, 1
      %p152 = por %p150, %p151
      %p153 = scmp.ne.s32.totalorder %s144, %s145
      %p154 = scmp.eq.s32.totalorder %s29, 0
      %p155 = por %p153, %p154
      %p156 = scmp.ne.s32.totalorder %s144, %s145
      %p157 = scmp.eq.s32.totalorder %s30, 1
      %p158 = por %p156, %p157
      %p160 = scmp.ne.s32.totalorder %s145, %s159
      %p161 = scmp.eq.s32.totalorder %s30, 0
      %p162 = por %p160, %p161
      %s164 = sadd.s32 %s163, 1
      %p167 = scmp.eq.s32.totalorder %s24, 1
      %p168 = scmp.ne.s32.totalorder %s163, %s165
      %p169 = scmp.eq.s32.totalorder %s24, 0
      %p170 = por %p168, %p169
      %p171 = scmp.ne.s32.totalorder %s163, %s165
      %p172 = scmp.eq.s32.totalorder %s29, 1
      %p173 = por %p171, %p172
      %p174 = scmp.ne.s32.totalorder %s165, %s166
      %p175 = scmp.eq.s32.totalorder %s29, 0
      %p176 = por %p174, %p175
      %p177 = scmp.ne.s32.totalorder %s165, %s166
      %p178 = scmp.eq.s32.totalorder %s30, 1
      %p179 = por %p177, %p178
      %p181 = scmp.ne.s32.totalorder %s166, %s180
      %p182 = scmp.eq.s32.totalorder %s30, 0
      %p183 = por %p181, %p182
      %s184 = ssub.s32 %s24, %s31
      %p185 = scmp.eq.s32.totalorder %s184, 0
      %s187 = sadd.s32 %s186, 1
      %s188 = scalar_select %p185, %s186, %s187
      %p191 = pneg %p185
      %p192 = scmp.eq.s32.totalorder %s24, 1
      %p193 = por %p191, %p192
      %p194 = scmp.ne.s32.totalorder %s186, %s189
      %p195 = scmp.eq.s32.totalorder %s24, 0
      %p196 = por %p194, %p195
      %p197 = scmp.ne.s32.totalorder %s186, %s189
      %p198 = scmp.eq.s32.totalorder %s29, 1
      %p199 = por %p197, %p198
      %p200 = scmp.ne.s32.totalorder %s189, %s190
      %p201 = scmp.eq.s32.totalorder %s29, 0
      %p202 = por %p200, %p201
      %p203 = scmp.ne.s32.totalorder %s189, %s190
      %p204 = scmp.eq.s32.totalorder %s30, 1
      %p205 = por %p203, %p204
      %p207 = scmp.ne.s32.totalorder %s190, %s206
      %p208 = scmp.eq.s32.totalorder %s30, 0
      %p209 = por %p207, %p208
      %s210 = ssub.s32 %s24, %s31
      %p211 = scmp.eq.s32.totalorder %s210, 0
      %s213 = sadd.s32 %s212, 1
      %s214 = scalar_select %p211, %s212, %s213
      %p217 = pneg %p211
      %p218 = scmp.eq.s32.totalorder %s24, 1
      %p219 = por %p217, %p218
      %p220 = scmp.ne.s32.totalorder %s212, %s215
      %p221 = scmp.eq.s32.totalorder %s24, 0
      %p222 = por %p220, %p221
      %p223 = scmp.ne.s32.totalorder %s212, %s215
      %p224 = scmp.eq.s32.totalorder %s29, 1
      %p225 = por %p223, %p224
      %p226 = scmp.ne.s32.totalorder %s215, %s216
      %p227 = scmp.eq.s32.totalorder %s29, 0
      %p228 = por %p226, %p227
      %p229 = scmp.ne.s32.totalorder %s215, %s216
      %p230 = scmp.eq.s32.totalorder %s30, 1
      %p231 = por %p229, %p230
      %p233 = scmp.ne.s32.totalorder %s216, %s232
      %p234 = scmp.eq.s32.totalorder %s30, 0
      %p235 = por %p233, %p234
      %p236 = scmp.le.s32.totalorder 1, %s24
      %p237 = scmp.lt.s32.totalorder %s24, 3
      %p238 = pnand %p236, %p237
      %p239 = pneg %p238
      // Predicated region
      $region9: #{_deep_timestep_forward.1} parent=5 // pred_check
        _
      $region10: #{_deep_timestep_forward.1} parent=5 // pred_check_branch
        %241 = sbr.rel (%p238) target = $region12
      $region11: #{_deep_timestep_forward.1} parent=5 // pred_region
        %s242 = ssub.s32 %s24, 1
        // Predicated region
        $region13: #{_deep_timestep_forward.1} parent=11 // pred_check
          %p243 = pneg %p71
        $region14: #{_deep_timestep_forward.1} parent=11 // pred_check_branch
          %245 = sbr.rel (%p243) target = $region16
        $region15: #{_deep_timestep_forward.1} parent=11 // pred_region
          %s247 = ssub.s32 2048, 2048
          %248 = vsyncadd [#allocation3], %s247
          %s249 = sshll.u32 [#allocation2], 4
          %s250 = int_to_ptr.vmem [resolvable:$true] %s249
          %255 = dma.hbm_to_vmem [thread:$0]  %s1, 2048, %s250, [#allocation3], 128, 128, 8
        $region16: #{_deep_timestep_forward.1} parent=11 // pred_fallthru
          _
        // Predicated region
        $region17: #{_deep_timestep_forward.1} parent=11 // pred_check
          %p256 = pneg %p92
        $region18: #{_deep_timestep_forward.1} parent=11 // pred_check_branch
          %258 = sbr.rel (%p256) target = $region20
        $region19: #{_deep_timestep_forward.1} parent=11 // pred_region
          %s260 = ssub.s32 2048, 2048
          %261 = vsyncadd [#allocation6], %s260
          %s262 = sshll.u32 [#allocation5], 4
          %s263 = int_to_ptr.vmem [resolvable:$true] %s262
          %268 = dma.hbm_to_vmem [thread:$0]  %s2, 2048, %s263, [#allocation6], 128, 128, 8
        $region20: #{_deep_timestep_forward.1} parent=11 // pred_fallthru
          _
        // Predicated region
        $region21: #{_deep_timestep_forward.1} parent=11 // pred_check
          %p269 = pneg %p113
        $region22: #{_deep_timestep_forward.1} parent=11 // pred_check_branch
          %271 = sbr.rel (%p269) target = $region24
        $region23: #{_deep_timestep_forward.1} parent=11 // pred_region
          %s273 = ssub.s32 2048, 2048
          %274 = vsyncadd [#allocation6], %s273
          %s275 = sshll.u32 [#allocation7], 4
          %s276 = int_to_ptr.vmem [resolvable:$true] %s275
          %281 = dma.hbm_to_vmem [thread:$0]  %s3, 2048, %s276, [#allocation6], 128, 128, 8
        $region24: #{_deep_timestep_forward.1} parent=11 // pred_fallthru
          _
        // Predicated region
        $region25: #{_deep_timestep_forward.1} parent=11 // pred_check
          %p282 = pneg %p134
        $region26: #{_deep_timestep_forward.1} parent=11 // pred_check_branch
          %284 = sbr.rel (%p282) target = $region28
        $region27: #{_deep_timestep_forward.1} parent=11 // pred_region
          _
        $region28: #{_deep_timestep_forward.1} parent=11 // pred_fallthru
          _
        // Predicated region
        $region29: #{_deep_timestep_forward.1} parent=11 // pred_check
          %p285 = pneg %p155
        $region30: #{_deep_timestep_forward.1} parent=11 // pred_check_branch
          %287 = sbr.rel (%p285) target = $region32
        $region31: #{_deep_timestep_forward.1} parent=11 // pred_region
          %s289 = ssub.s32 2048, 2048
          %290 = vsyncadd [#allocation9], %s289
          %s291 = sshll.u32 [#allocation8], 4
          %s292 = int_to_ptr.vmem [resolvable:$true] %s291
          %297 = dma.hbm_to_vmem [thread:$0]  %s5, 2048, %s292, [#allocation9], 128, 128, 8
        $region32: #{_deep_timestep_forward.1} parent=11 // pred_fallthru
          _
        // Predicated region
        $region33: #{_deep_timestep_forward.1} parent=11 // pred_check
          %p298 = pneg %p176
        $region34: #{_deep_timestep_forward.1} parent=11 // pred_check_branch
          %300 = sbr.rel (%p298) target = $region36
        $region35: #{_deep_timestep_forward.1} parent=11 // pred_region
          _
        $region36: #{_deep_timestep_forward.1} parent=11 // pred_fallthru
          _
      $region12: #{_deep_timestep_forward.1} parent=5 // pred_fallthru
        _
      %p301 = scmp.lt.s32.totalorder %s24, 2
      // Predicated region
      $region37: #{_deep_timestep_forward.1} parent=5 // pred_check
        %p302 = pneg %p301
      $region38: #{_deep_timestep_forward.1} parent=5 // pred_check_branch
        %304 = sbr.rel (%p302) target = $region40
      $region39: #{_deep_timestep_forward.1} parent=5 // pred_region
        // Predicated region
        $region41: #{_deep_timestep_forward.1} parent=39 // pred_check
          %p305 = pneg %p44
        $region42: #{_deep_timestep_forward.1} parent=39 // pred_check_branch
          %307 = sbr.rel (%p305) target = $region44
        $region43: #{_deep_timestep_forward.1} parent=39 // pred_region
          %p308 = scmp.lt.s32.totalorder %s24, 1
          %s309 = scalar_select %p308, %s24, 1
          %s310 = smul.addr %s309, 8
          %s311 = scalar_lea.vmem %s0, %s310
        $region44: #{_deep_timestep_forward.1} parent=39 // pred_fallthru
          _
      $region40: #{_deep_timestep_forward.1} parent=5 // pred_fallthru
        _
      %p312 = scmp.le.s32.totalorder 1, %s24
      %p313 = scmp.lt.s32.totalorder %s24, 3
      %p314 = pnand %p312, %p313
      %p315 = pneg %p314
      // Predicated region
      $region45: #{_deep_timestep_forward.1} parent=5 // pred_check
        _
      $region46: #{_deep_timestep_forward.1} parent=5 // pred_check_branch
        %317 = sbr.rel (%p314) target = $region48
      $region47: #{_deep_timestep_forward.1} parent=5 // pred_region
        %s318 = ssub.s32 %s24, 1
        // Predicated region
        $region49: #{_deep_timestep_forward.1} parent=47 // pred_check
          %p319 = pneg %p71
        $region50: #{_deep_timestep_forward.1} parent=47 // pred_check_branch
          %321 = sbr.rel (%p319) target = $region52
        $region51: #{_deep_timestep_forward.1} parent=47 // pred_region
          %322 = dma.done [#allocation3], 2048
        $region52: #{_deep_timestep_forward.1} parent=47 // pred_fallthru
          _
        // Predicated region
        $region53: #{_deep_timestep_forward.1} parent=47 // pred_check
          %p323 = pneg %p92
        $region54: #{_deep_timestep_forward.1} parent=47 // pred_check_branch
          %325 = sbr.rel (%p323) target = $region56
        $region55: #{_deep_timestep_forward.1} parent=47 // pred_region
          %326 = dma.done [#allocation6], 2048
        $region56: #{_deep_timestep_forward.1} parent=47 // pred_fallthru
          _
        // Predicated region
        $region57: #{_deep_timestep_forward.1} parent=47 // pred_check
          %p327 = pneg %p113
        $region58: #{_deep_timestep_forward.1} parent=47 // pred_check_branch
          %329 = sbr.rel (%p327) target = $region60
        $region59: #{_deep_timestep_forward.1} parent=47 // pred_region
          %330 = dma.done [#allocation6], 2048
        $region60: #{_deep_timestep_forward.1} parent=47 // pred_fallthru
          _
        // Predicated region
        $region61: #{_deep_timestep_forward.1} parent=47 // pred_check
          %p331 = pneg %p155
        $region62: #{_deep_timestep_forward.1} parent=47 // pred_check_branch
          %333 = sbr.rel (%p331) target = $region64
        $region63: #{_deep_timestep_forward.1} parent=47 // pred_region
          %334 = dma.done [#allocation9], 2048
        $region64: #{_deep_timestep_forward.1} parent=47 // pred_fallthru
          _
        %p335 = scmp.lt.s32.totalorder %s29, 1
        %s336 = scalar_select %p335, %s29, 1
        %s337 = smul.addr %s336, 8
        %s338 = scalar_lea.vmem %s0, %s337
        %p339 = pneg %p50
        %p340 = pneg %p47
        %p341 = pneg %p71
        %p342 = pneg %p68
        %p343 = pneg %p92
        %p344 = pneg %p89
        %p345 = pneg %p113
        %p346 = pneg %p110
        %p347 = pneg %p134
        %p348 = pneg %p131
        %p349 = pneg %p155
        %p350 = pneg %p152
        %p351 = pneg %p176
        %p352 = pneg %p173
        %p353 = pneg %p202
        %p354 = pneg %p199
        %s355 = sand.u32 %s189, 1
        %s356 = scalar_lea.sflag [#allocation4], %s355
        %s357 = sand.u32 %s189, 1
        %s358 = smul.addr %s357, 8
        %s359 = scalar_lea.vmem [#allocation10], %s358
        %p360 = pneg %p228
        %p361 = pneg %p225
        %s362 = sand.u32 %s215, 1
        %s363 = scalar_lea.sflag [#allocation12], %s362
        %s364 = sand.u32 %s215, 1
        %s365 = smul.addr %s364, 8
        %s366 = scalar_lea.vmem [#allocation11], %s365
        %p367 = scmp.lt.s32.totalorder %s29, 1
        %s368 = scalar_select %p367, %s29, 1
        %s369 = smul.addr %s368, 8
        %s370 = scalar_lea.vmem %s0, %s369
        %v371 = vlaneseq
        %v372 = vand.u32 %v371, 127
        %v373 = vld [vmem:[#allocation2] sm:$0xff]
        %v374 = vld [vmem:[#allocation2 + $0x8] sm:$0xff]
        %v375 = vld [vmem:[#allocation2 + $0x10] sm:$0xff]
        %v376 = vld [vmem:[#allocation2 + $0x18] sm:$0xff]
        %v377 = vld [vmem:[#allocation2 + $0x20] sm:$0xff]
        %v378 = vld [vmem:[#allocation2 + $0x28] sm:$0xff]
        %v379 = vld [vmem:[#allocation2 + $0x30] sm:$0xff]
        %v380 = vld [vmem:[#allocation2 + $0x38] sm:$0xff]
        %v381 = vld [vmem:[#allocation2 + $0x40] sm:$0xff]
        %v382 = vld [vmem:[#allocation2 + $0x48] sm:$0xff]
        %v383 = vld [vmem:[#allocation2 + $0x50] sm:$0xff]
        %v384 = vld [vmem:[#allocation2 + $0x58] sm:$0xff]
        %v385 = vld [vmem:[#allocation2 + $0x60] sm:$0xff]
        %v386 = vld [vmem:[#allocation2 + $0x68] sm:$0xff]
        %v387 = vld [vmem:[#allocation2 + $0x70] sm:$0xff]
        %v388 = vld [vmem:[#allocation2 + $0x78] sm:$0xff]
        %v389 = vld [vmem:[%s370] sm:$0xff]
        %390 = vset.pattern.permute.xlu0 0
        %391 = vperm.xlu0 %390, %v389
        %v392 = vpop.permute.xlu0 %391
        %vm393 = vcmp.eq.s32.totalorder %v392, %v372
        %394 = vset.pattern.permute.xlu0 1
        %395 = vperm.xlu0 %394, %v389
        %v396 = vpop.permute.xlu0 %395
        %vm397 = vcmp.eq.s32.totalorder %v396, %v372
        %vm398 = vmor %vm393, %vm397
        %v399 = vsel %vm398, 1, 0
        %v400 = vcvt.s32.f32 %v399
        %401 = vmatprep.subr.mxu0 0.0
        %402 = vmatpush1.msra.mxu0 %v373
        %403 = vmatprep.subr.mxu0 0.0
        %404 = vmatpush1.msra.mxu0 %v374
        %405 = vmatprep.subr.mxu0 0.0
        %406 = vmatpush1.msra.mxu0 %v375
        %407 = vmatprep.subr.mxu0 0.0
        %408 = vmatpush1.msra.mxu0 %v376
        %409 = vmatprep.subr.mxu0 0.0
        %410 = vmatpush1.msra.mxu0 %v377
        %411 = vmatprep.subr.mxu0 0.0
        %412 = vmatpush1.msra.mxu0 %v378
        %413 = vmatprep.subr.mxu0 0.0
        %414 = vmatpush1.msra.mxu0 %v379
        %415 = vmatprep.subr.mxu0 0.0
        %416 = vmatpush1.msra.mxu0 %v380
        %417 = vmatprep.subr.mxu0 0.0
        %418 = vmatpush1.msra.mxu0 %v381
        %419 = vmatprep.subr.mxu0 0.0
        %420 = vmatpush1.msra.mxu0 %v382
        %421 = vmatprep.subr.mxu0 0.0
        %422 = vmatpush1.msra.mxu0 %v383
        %423 = vmatprep.subr.mxu0 0.0
        %424 = vmatpush1.msra.mxu0 %v384
        %425 = vmatprep.subr.mxu0 0.0
        %426 = vmatpush1.msra.mxu0 %v385
        %427 = vmatprep.subr.mxu0 0.0
        %428 = vmatpush1.msra.mxu0 %v386
        %429 = vmatprep.subr.mxu0 0.0
        %430 = vmatpush1.msra.mxu0 %v387
        %431 = vmatprep.subr.mxu0 0.0
        %432 = vmatpush1.msra.mxu0 %v388
        %433 = vmatprep.subr.mxu0 0.0
        %434 = vmatpush1.msra.mxu0 0.0
        %435 = vmatprep.subr.mxu0 0.0
        %436 = vmatpush1.msra.mxu0 0.0
        %437 = vmatprep.subr.mxu0 0.0
        %438 = vmatpush1.msra.mxu0 0.0
        %439 = vmatprep.subr.mxu0 0.0
        %440 = vmatpush1.msra.mxu0 0.0
        %441 = vmatprep.subr.mxu0 0.0
        %442 = vmatpush1.msra.mxu0 0.0
        %443 = vmatprep.subr.mxu0 0.0
        %444 = vmatpush1.msra.mxu0 0.0
        %445 = vmatprep.subr.mxu0 0.0
        %446 = vmatpush1.msra.mxu0 0.0
        %447 = vmatprep.subr.mxu0 0.0
        %448 = vmatpush1.msra.mxu0 0.0
        %449 = vmatprep.subr.mxu0 0.0
        %450 = vmatpush1.msra.mxu0 0.0
        %451 = vmatprep.subr.mxu0 0.0
        %452 = vmatpush1.msra.mxu0 0.0
        %453 = vmatprep.subr.mxu0 0.0
        %454 = vmatpush1.msra.mxu0 0.0
        %455 = vmatprep.subr.mxu0 0.0
        %456 = vmatpush1.msra.mxu0 0.0
        %457 = vmatprep.subr.mxu0 0.0
        %458 = vmatpush1.msra.mxu0 0.0
        %459 = vmatprep.subr.mxu0 0.0
        %460 = vmatpush1.msra.mxu0 0.0
        %461 = vmatprep.subr.mxu0 0.0
        %462 = vmatpush1.msra.mxu0 0.0
        %463 = vmatprep.subr.mxu0 0.0
        %464 = vmatpush1.msra.mxu0 0.0
        %465 = vmatprep.mubr.f32.mxu0 0.0
        %466 = vmatmul.mubr.f32.gmra.mrb[0].mxu0 %v400
        %v467 = vpop.f32.mrb[0].mxu0
        %v468 = vadd.f32 0.0, %v467
        %v469 = vpop.f32.mrb[0].mxu0
        %470 = vdwg.mxu0
        %471 = vset.pattern.permute.xlu0 2
        %472 = vperm.xlu0 %471, %v389
        %v473 = vpop.permute.xlu0 %472
        %vm474 = vcmp.eq.s32.totalorder %v473, %v372
        %475 = vset.pattern.permute.xlu0 3
        %476 = vperm.xlu0 %475, %v389
        %v477 = vpop.permute.xlu0 %476
        %vm478 = vcmp.eq.s32.totalorder %v477, %v372
        %vm479 = vmor %vm474, %vm478
        %v480 = vsel %vm479, 1, 0
        %v481 = vcvt.s32.f32 %v480
        %482 = vmatprep.subr.mxu0 0.0
        %483 = vmatpush1.msra.mxu0 %v373
        %484 = vmatprep.subr.mxu0 0.0
        %485 = vmatpush1.msra.mxu0 %v374
        %486 = vmatprep.subr.mxu0 0.0
        %487 = vmatpush1.msra.mxu0 %v375
        %488 = vmatprep.subr.mxu0 0.0
        %489 = vmatpush1.msra.mxu0 %v376
        %490 = vmatprep.subr.mxu0 0.0
        %491 = vmatpush1.msra.mxu0 %v377
        %492 = vmatprep.subr.mxu0 0.0
        %493 = vmatpush1.msra.mxu0 %v378
        %494 = vmatprep.subr.mxu0 0.0
        %495 = vmatpush1.msra.mxu0 %v379
        %496 = vmatprep.subr.mxu0 0.0
        %497 = vmatpush1.msra.mxu0 %v380
        %498 = vmatprep.subr.mxu0 0.0
        %499 = vmatpush1.msra.mxu0 %v381
        %500 = vmatprep.subr.mxu0 0.0
        %501 = vmatpush1.msra.mxu0 %v382
        %502 = vmatprep.subr.mxu0 0.0
        %503 = vmatpush1.msra.mxu0 %v383
        %504 = vmatprep.subr.mxu0 0.0
        %505 = vmatpush1.msra.mxu0 %v384
        %506 = vmatprep.subr.mxu0 0.0
        %507 = vmatpush1.msra.mxu0 %v385
        %508 = vmatprep.subr.mxu0 0.0
        %509 = vmatpush1.msra.mxu0 %v386
        %510 = vmatprep.subr.mxu0 0.0
        %511 = vmatpush1.msra.mxu0 %v387
        %512 = vmatprep.subr.mxu0 0.0
        %513 = vmatpush1.msra.mxu0 %v388
        %514 = vmatprep.subr.mxu0 0.0
        %515 = vmatpush1.msra.mxu0 0.0
        %516 = vmatprep.subr.mxu0 0.0
        %517 = vmatpush1.msra.mxu0 0.0
        %518 = vmatprep.subr.mxu0 0.0
        %519 = vmatpush1.msra.mxu0 0.0
        %520 = vmatprep.subr.mxu0 0.0
        %521 = vmatpush1.msra.mxu0 0.0
        %522 = vmatprep.subr.mxu0 0.0
        %523 = vmatpush1.msra.mxu0 0.0
        %524 = vmatprep.subr.mxu0 0.0
        %525 = vmatpush1.msra.mxu0 0.0
        %526 = vmatprep.subr.mxu0 0.0
        %527 = vmatpush1.msra.mxu0 0.0
        %528 = vmatprep.subr.mxu0 0.0
        %529 = vmatpush1.msra.mxu0 0.0
        %530 = vmatprep.subr.mxu0 0.0
        %531 = vmatpush1.msra.mxu0 0.0
        %532 = vmatprep.subr.mxu0 0.0
        %533 = vmatpush1.msra.mxu0 0.0
        %534 = vmatprep.subr.mxu0 0.0
        %535 = vmatpush1.msra.mxu0 0.0
        %536 = vmatprep.subr.mxu0 0.0
        %537 = vmatpush1.msra.mxu0 0.0
        %538 = vmatprep.subr.mxu0 0.0
        %539 = vmatpush1.msra.mxu0 0.0
        %540 = vmatprep.subr.mxu0 0.0
        %541 = vmatpush1.msra.mxu0 0.0
        %542 = vmatprep.subr.mxu0 0.0
        %543 = vmatpush1.msra.mxu0 0.0
        %544 = vmatprep.subr.mxu0 0.0
        %545 = vmatpush1.msra.mxu0 0.0
        %546 = vmatprep.mubr.f32.mxu0 0.0
        %547 = vmatmul.mubr.f32.gmra.mrb[0].mxu0 %v481
        %v548 = vpop.f32.mrb[0].mxu0
        %v549 = vadd.f32 0.0, %v548
        %v550 = vpop.f32.mrb[0].mxu0
        %551 = vdwg.mxu0
        %vm552 = vcmp.gt.f32.partialorder %v549, %v468
        %v553 = vsel %vm552, 1, 0
        %v554 = vsel %vm552, %v549, %v468
        %v555 = vadd.f32 %v468, %v549
        %556 = vset.pattern.permute.xlu0 4
        %557 = vperm.xlu0 %556, %v389
        %v558 = vpop.permute.xlu0 %557
        %vm559 = vcmp.eq.s32.totalorder %v558, %v372
        %560 = vset.pattern.permute.xlu0 5
        %561 = vperm.xlu0 %560, %v389
        %v562 = vpop.permute.xlu0 %561
        %vm563 = vcmp.eq.s32.totalorder %v562, %v372
        %vm564 = vmor %vm559, %vm563
        %v565 = vsel %vm564, 1, 0
        %v566 = vcvt.s32.f32 %v565
        %567 = vmatprep.subr.mxu0 0.0
        %568 = vmatpush1.msra.mxu0 %v373
        %569 = vmatprep.subr.mxu0 0.0
        %570 = vmatpush1.msra.mxu0 %v374
        %571 = vmatprep.subr.mxu0 0.0
        %572 = vmatpush1.msra.mxu0 %v375
        %573 = vmatprep.subr.mxu0 0.0
        %574 = vmatpush1.msra.mxu0 %v376
        %575 = vmatprep.subr.mxu0 0.0
        %576 = vmatpush1.msra.mxu0 %v377
        %577 = vmatprep.subr.mxu0 0.0
        %578 = vmatpush1.msra.mxu0 %v378
        %579 = vmatprep.subr.mxu0 0.0
        %580 = vmatpush1.msra.mxu0 %v379
        %581 = vmatprep.subr.mxu0 0.0
        %582 = vmatpush1.msra.mxu0 %v380
        %583 = vmatprep.subr.mxu0 0.0
        %584 = vmatpush1.msra.mxu0 %v381
        %585 = vmatprep.subr.mxu0 0.0
        %586 = vmatpush1.msra.mxu0 %v382
        %587 = vmatprep.subr.mxu0 0.0
        %588 = vmatpush1.msra.mxu0 %v383
        %589 = vmatprep.subr.mxu0 0.0
        %590 = vmatpush1.msra.mxu0 %v384
        %591 = vmatprep.subr.mxu0 0.0
        %592 = vmatpush1.msra.mxu0 %v385
        %593 = vmatprep.subr.mxu0 0.0
        %594 = vmatpush1.msra.mxu0 %v386
        %595 = vmatprep.subr.mxu0 0.0
        %596 = vmatpush1.msra.mxu0 %v387
        %597 = vmatprep.subr.mxu0 0.0
        %598 = vmatpush1.msra.mxu0 %v388
        %599 = vmatprep.subr.mxu0 0.0
        %600 = vmatpush1.msra.mxu0 0.0
        %601 = vmatprep.subr.mxu0 0.0
        %602 = vmatpush1.msra.mxu0 0.0
        %603 = vmatprep.subr.mxu0 0.0
        %604 = vmatpush1.msra.mxu0 0.0
        %605 = vmatprep.subr.mxu0 0.0
        %606 = vmatpush1.msra.mxu0 0.0
        %607 = vmatprep.subr.mxu0 0.0
        %608 = vmatpush1.msra.mxu0 0.0
        %609 = vmatprep.subr.mxu0 0.0
        %610 = vmatpush1.msra.mxu0 0.0
        %611 = vmatprep.subr.mxu0 0.0
        %612 = vmatpush1.msra.mxu0 0.0
        %613 = vmatprep.subr.mxu0 0.0
        %614 = vmatpush1.msra.mxu0 0.0
        %615 = vmatprep.subr.mxu0 0.0
        %616 = vmatpush1.msra.mxu0 0.0
        %617 = vmatprep.subr.mxu0 0.0
        %618 = vmatpush1.msra.mxu0 0.0
        %619 = vmatprep.subr.mxu0 0.0
        %620 = vmatpush1.msra.mxu0 0.0
        %621 = vmatprep.subr.mxu0 0.0
        %622 = vmatpush1.msra.mxu0 0.0
        %623 = vmatprep.subr.mxu0 0.0
        %624 = vmatpush1.msra.mxu0 0.0
        %625 = vmatprep.subr.mxu0 0.0
        %626 = vmatpush1.msra.mxu0 0.0
        %627 = vmatprep.subr.mxu0 0.0
        %628 = vmatpush1.msra.mxu0 0.0
        %629 = vmatprep.subr.mxu0 0.0
        %630 = vmatpush1.msra.mxu0 0.0
        %631 = vmatprep.mubr.f32.mxu0 0.0
        %632 = vmatmul.mubr.f32.gmra.mrb[0].mxu0 %v566
        %v633 = vpop.f32.mrb[0].mxu0
        %v634 = vadd.f32 0.0, %v633
        %v635 = vpop.f32.mrb[0].mxu0
        %636 = vdwg.mxu0
        %vm637 = vcmp.gt.f32.partialorder %v634, %v554
        %v638 = vsel %vm637, 2, %v553
        %v639 = vsel %vm637, %v634, %v554
        %v640 = vadd.f32 %v555, %v634
        %641 = vset.pattern.permute.xlu0 6
        %642 = vperm.xlu0 %641, %v389
        %v643 = vpop.permute.xlu0 %642
        %vm644 = vcmp.eq.s32.totalorder %v643, %v372
        %645 = vset.pattern.permute.xlu0 7
        %646 = vperm.xlu0 %645, %v389
        %v647 = vpop.permute.xlu0 %646
        %vm648 = vcmp.eq.s32.totalorder %v647, %v372
        %vm649 = vmor %vm644, %vm648
        %v650 = vsel %vm649, 1, 0
        %v651 = vcvt.s32.f32 %v650
        %652 = vmatprep.subr.mxu0 0.0
        %653 = vmatpush1.msra.mxu0 %v373
        %654 = vmatprep.subr.mxu0 0.0
        %655 = vmatpush1.msra.mxu0 %v374
        %656 = vmatprep.subr.mxu0 0.0
        %657 = vmatpush1.msra.mxu0 %v375
        %658 = vmatprep.subr.mxu0 0.0
        %659 = vmatpush1.msra.mxu0 %v376
        %660 = vmatprep.subr.mxu0 0.0
        %661 = vmatpush1.msra.mxu0 %v377
        %662 = vmatprep.subr.mxu0 0.0
        %663 = vmatpush1.msra.mxu0 %v378
        %664 = vmatprep.subr.mxu0 0.0
        %665 = vmatpush1.msra.mxu0 %v379
        %666 = vmatprep.subr.mxu0 0.0
        %667 = vmatpush1.msra.mxu0 %v380
        %668 = vmatprep.subr.mxu0 0.0
        %669 = vmatpush1.msra.mxu0 %v381
        %670 = vmatprep.subr.mxu0 0.0
        %671 = vmatpush1.msra.mxu0 %v382
        %672 = vmatprep.subr.mxu0 0.0
        %673 = vmatpush1.msra.mxu0 %v383
        %674 = vmatprep.subr.mxu0 0.0
        %675 = vmatpush1.msra.mxu0 %v384
        %676 = vmatprep.subr.mxu0 0.0
        %677 = vmatpush1.msra.mxu0 %v385
        %678 = vmatprep.subr.mxu0 0.0
        %679 = vmatpush1.msra.mxu0 %v386
        %680 = vmatprep.subr.mxu0 0.0
        %681 = vmatpush1.msra.mxu0 %v387
        %682 = vmatprep.subr.mxu0 0.0
        %683 = vmatpush1.msra.mxu0 %v388
        %684 = vmatprep.subr.mxu0 0.0
        %685 = vmatpush1.msra.mxu0 0.0
        %686 = vmatprep.subr.mxu0 0.0
        %687 = vmatpush1.msra.mxu0 0.0
        %688 = vmatprep.subr.mxu0 0.0
        %689 = vmatpush1.msra.mxu0 0.0
        %690 = vmatprep.subr.mxu0 0.0
        %691 = vmatpush1.msra.mxu0 0.0
        %692 = vmatprep.subr.mxu0 0.0
        %693 = vmatpush1.msra.mxu0 0.0
        %694 = vmatprep.subr.mxu0 0.0
        %695 = vmatpush1.msra.mxu0 0.0
        %696 = vmatprep.subr.mxu0 0.0
        %697 = vmatpush1.msra.mxu0 0.0
        %698 = vmatprep.subr.mxu0 0.0
        %699 = vmatpush1.msra.mxu0 0.0
        %700 = vmatprep.subr.mxu0 0.0
        %701 = vmatpush1.msra.mxu0 0.0
        %702 = vmatprep.subr.mxu0 0.0
        %703 = vmatpush1.msra.mxu0 0.0
        %704 = vmatprep.subr.mxu0 0.0
        %705 = vmatpush1.msra.mxu0 0.0
        %706 = vmatprep.subr.mxu0 0.0
        %707 = vmatpush1.msra.mxu0 0.0
        %708 = vmatprep.subr.mxu0 0.0
        %709 = vmatpush1.msra.mxu0 0.0
        %710 = vmatprep.subr.mxu0 0.0
        %711 = vmatpush1.msra.mxu0 0.0
        %712 = vmatprep.subr.mxu0 0.0
        %713 = vmatpush1.msra.mxu0 0.0
        %714 = vmatprep.subr.mxu0 0.0
        %715 = vmatpush1.msra.mxu0 0.0
        %716 = vmatprep.mubr.f32.mxu0 0.0
        %717 = vmatmul.mubr.f32.gmra.mrb[0].mxu0 %v651
        %v718 = vpop.f32.mrb[0].mxu0
        %v719 = vadd.f32 0.0, %v718
        %v720 = vpop.f32.mrb[0].mxu0
        %721 = vdwg.mxu0
        %vm722 = vcmp.gt.f32.partialorder %v719, %v639
        %v723 = vsel %vm722, 3, %v638
        %v724 = vsel %vm722, %v719, %v639
        %v725 = vadd.f32 %v640, %v719
        %v726 = vld [vmem:[#allocation5] sm:$0xff]
        %v727 = vld [vmem:[#allocation5 + $0x8] sm:$0xff]
        %v728 = vld [vmem:[#allocation5 + $0x10] sm:$0xff]
        %v729 = vld [vmem:[#allocation5 + $0x18] sm:$0xff]
        %v730 = vld [vmem:[#allocation5 + $0x20] sm:$0xff]
        %v731 = vld [vmem:[#allocation5 + $0x28] sm:$0xff]
        %v732 = vld [vmem:[#allocation5 + $0x30] sm:$0xff]
        %v733 = vld [vmem:[#allocation5 + $0x38] sm:$0xff]
        %v734 = vld [vmem:[#allocation5 + $0x40] sm:$0xff]
        %v735 = vld [vmem:[#allocation5 + $0x48] sm:$0xff]
        %v736 = vld [vmem:[#allocation5 + $0x50] sm:$0xff]
        %v737 = vld [vmem:[#allocation5 + $0x58] sm:$0xff]
        %v738 = vld [vmem:[#allocation5 + $0x60] sm:$0xff]
        %v739 = vld [vmem:[#allocation5 + $0x68] sm:$0xff]
        %v740 = vld [vmem:[#allocation5 + $0x70] sm:$0xff]
        %v741 = vld [vmem:[#allocation5 + $0x78] sm:$0xff]
        %v742 = vld [vmem:[#allocation7] sm:$0xff]
        %v743 = vld [vmem:[#allocation7 + $0x8] sm:$0xff]
        %v744 = vld [vmem:[#allocation7 + $0x10] sm:$0xff]
        %v745 = vld [vmem:[#allocation7 + $0x18] sm:$0xff]
        %v746 = vld [vmem:[#allocation7 + $0x20] sm:$0xff]
        %v747 = vld [vmem:[#allocation7 + $0x28] sm:$0xff]
        %v748 = vld [vmem:[#allocation7 + $0x30] sm:$0xff]
        %v749 = vld [vmem:[#allocation7 + $0x38] sm:$0xff]
        %v750 = vld [vmem:[#allocation7 + $0x40] sm:$0xff]
        %v751 = vld [vmem:[#allocation7 + $0x48] sm:$0xff]
        %v752 = vld [vmem:[#allocation7 + $0x50] sm:$0xff]
        %v753 = vld [vmem:[#allocation7 + $0x58] sm:$0xff]
        %v754 = vld [vmem:[#allocation7 + $0x60] sm:$0xff]
        %v755 = vld [vmem:[#allocation7 + $0x68] sm:$0xff]
        %v756 = vld [vmem:[#allocation7 + $0x70] sm:$0xff]
        %v757 = vld [vmem:[#allocation7 + $0x78] sm:$0xff]
        %758 = vmatprep.subr.mxu0 0.0
        %759 = vmatpush1.msra.mxu0 %v742
        %760 = vmatprep.subr.mxu0 0.0
        %761 = vmatpush1.msra.mxu0 %v743
        %762 = vmatprep.subr.mxu0 0.0
        %763 = vmatpush1.msra.mxu0 %v744
        %764 = vmatprep.subr.mxu0 0.0
        %765 = vmatpush1.msra.mxu0 %v745
        %766 = vmatprep.subr.mxu0 0.0
        %767 = vmatpush1.msra.mxu0 %v746
        %768 = vmatprep.subr.mxu0 0.0
        %769 = vmatpush1.msra.mxu0 %v747
        %770 = vmatprep.subr.mxu0 0.0
        %771 = vmatpush1.msra.mxu0 %v748
        %772 = vmatprep.subr.mxu0 0.0
        %773 = vmatpush1.msra.mxu0 %v749
        %774 = vmatprep.subr.mxu0 0.0
        %775 = vmatpush1.msra.mxu0 %v750
        %776 = vmatprep.subr.mxu0 0.0
        %777 = vmatpush1.msra.mxu0 %v751
        %778 = vmatprep.subr.mxu0 0.0
        %779 = vmatpush1.msra.mxu0 %v752
        %780 = vmatprep.subr.mxu0 0.0
        %781 = vmatpush1.msra.mxu0 %v753
        %782 = vmatprep.subr.mxu0 0.0
        %783 = vmatpush1.msra.mxu0 %v754
        %784 = vmatprep.subr.mxu0 0.0
        %785 = vmatpush1.msra.mxu0 %v755
        %786 = vmatprep.subr.mxu0 0.0
        %787 = vmatpush1.msra.mxu0 %v756
        %788 = vmatprep.subr.mxu0 0.0
        %789 = vmatpush1.msra.mxu0 %v757
        %790 = vmatprep.subr.mxu0 0.0
        %791 = vmatpush1.msra.mxu0 0.0
        %792 = vmatprep.subr.mxu0 0.0
        %793 = vmatpush1.msra.mxu0 0.0
        %794 = vmatprep.subr.mxu0 0.0
        %795 = vmatpush1.msra.mxu0 0.0
        %796 = vmatprep.subr.mxu0 0.0
        %797 = vmatpush1.msra.mxu0 0.0
        %798 = vmatprep.subr.mxu0 0.0
        %799 = vmatpush1.msra.mxu0 0.0
        %800 = vmatprep.subr.mxu0 0.0
        %801 = vmatpush1.msra.mxu0 0.0
        %802 = vmatprep.subr.mxu0 0.0
        %803 = vmatpush1.msra.mxu0 0.0
        %804 = vmatprep.subr.mxu0 0.0
        %805 = vmatpush1.msra.mxu0 0.0
        %806 = vmatprep.subr.mxu0 0.0
        %807 = vmatpush1.msra.mxu0 0.0
        %808 = vmatprep.subr.mxu0 0.0
        %809 = vmatpush1.msra.mxu0 0.0
        %810 = vmatprep.subr.mxu0 0.0
        %811 = vmatpush1.msra.mxu0 0.0
        %812 = vmatprep.subr.mxu0 0.0
        %813 = vmatpush1.msra.mxu0 0.0
        %814 = vmatprep.subr.mxu0 0.0
        %815 = vmatpush1.msra.mxu0 0.0
        %816 = vmatprep.subr.mxu0 0.0
        %817 = vmatpush1.msra.mxu0 0.0
        %818 = vmatprep.subr.mxu0 0.0
        %819 = vmatpush1.msra.mxu0 0.0
        %820 = vmatprep.subr.mxu0 0.0
        %821 = vmatpush1.msra.mxu0 0.0
        %822 = vmatprep.mubr.f32.mxu0 0.0
        %823 = vmatmul.mubr.f32.gmra.mrb[0].mxu0 %v725
        %v824 = vpop.f32.mrb[0].mxu0
        %v825 = vadd.f32 0.0, %v824
        %v826 = vpop.f32.mrb[0].mxu0
        %827 = vdwg.mxu0
        %828 = vmatprep.subr.mxu0 0.0
        %829 = vmatpush1.msra.mxu0 %v726
        %830 = vmatprep.subr.mxu0 0.0
        %831 = vmatpush1.msra.mxu0 %v727
        %832 = vmatprep.subr.mxu0 0.0
        %833 = vmatpush1.msra.mxu0 %v728
        %834 = vmatprep.subr.mxu0 0.0
        %835 = vmatpush1.msra.mxu0 %v729
        %836 = vmatprep.subr.mxu0 0.0
        %837 = vmatpush1.msra.mxu0 %v730
        %838 = vmatprep.subr.mxu0 0.0
        %839 = vmatpush1.msra.mxu0 %v731
        %840 = vmatprep.subr.mxu0 0.0
        %841 = vmatpush1.msra.mxu0 %v732
        %842 = vmatprep.subr.mxu0 0.0
        %843 = vmatpush1.msra.mxu0 %v733
        %844 = vmatprep.subr.mxu0 0.0
        %845 = vmatpush1.msra.mxu0 %v734
        %846 = vmatprep.subr.mxu0 0.0
        %847 = vmatpush1.msra.mxu0 %v735
        %848 = vmatprep.subr.mxu0 0.0
        %849 = vmatpush1.msra.mxu0 %v736
        %850 = vmatprep.subr.mxu0 0.0
        %851 = vmatpush1.msra.mxu0 %v737
        %852 = vmatprep.subr.mxu0 0.0
        %853 = vmatpush1.msra.mxu0 %v738
        %854 = vmatprep.subr.mxu0 0.0
        %855 = vmatpush1.msra.mxu0 %v739
        %856 = vmatprep.subr.mxu0 0.0
        %857 = vmatpush1.msra.mxu0 %v740
        %858 = vmatprep.subr.mxu0 0.0
        %859 = vmatpush1.msra.mxu0 %v741
        %860 = vmatprep.subr.mxu0 0.0
        %861 = vmatpush1.msra.mxu0 0.0
        %862 = vmatprep.subr.mxu0 0.0
        %863 = vmatpush1.msra.mxu0 0.0
        %864 = vmatprep.subr.mxu0 0.0
        %865 = vmatpush1.msra.mxu0 0.0
        %866 = vmatprep.subr.mxu0 0.0
        %867 = vmatpush1.msra.mxu0 0.0
        %868 = vmatprep.subr.mxu0 0.0
        %869 = vmatpush1.msra.mxu0 0.0
        %870 = vmatprep.subr.mxu0 0.0
        %871 = vmatpush1.msra.mxu0 0.0
        %872 = vmatprep.subr.mxu0 0.0
        %873 = vmatpush1.msra.mxu0 0.0
        %874 = vmatprep.subr.mxu0 0.0
        %875 = vmatpush1.msra.mxu0 0.0
        %876 = vmatprep.subr.mxu0 0.0
        %877 = vmatpush1.msra.mxu0 0.0
        %878 = vmatprep.subr.mxu0 0.0
        %879 = vmatpush1.msra.mxu0 0.0
        %880 = vmatprep.subr.mxu0 0.0
        %881 = vmatpush1.msra.mxu0 0.0
        %882 = vmatprep.subr.mxu0 0.0
        %883 = vmatpush1.msra.mxu0 0.0
        %884 = vmatprep.subr.mxu0 0.0
        %885 = vmatpush1.msra.mxu0 0.0
        %886 = vmatprep.subr.mxu0 0.0
        %887 = vmatpush1.msra.mxu0 0.0
        %888 = vmatprep.subr.mxu0 0.0
        %889 = vmatpush1.msra.mxu0 0.0
        %890 = vmatprep.subr.mxu0 0.0
        %891 = vmatpush1.msra.mxu0 0.0
        %892 = vmatprep.mubr.f32.mxu0 0.0
        %893 = vmatmul.mubr.f32.gmra.mrb[0].mxu0 %v724
        %v894 = vpop.f32.mrb[0].mxu0
        %v895 = vadd.f32 %v825, %v894
        %v896 = vpop.f32.mrb[0].mxu0
        %897 = vdwg.mxu0
        %v898 = vld [vmem:[%s4] sm:$0x1]
        %v900 = vlaneseq
        %v901 = vshrl.u32 %v900, 7
        %v902 = vsub.s32 0, %v901
        %v903 = vrot.slane %v898, %v902
        %v905 = vadd.f32 %v895, %v903
        %v906 = vmax.f32 %v905, 0.0
        %v907 = vld [vmem:[#allocation8] sm:$0xff]
        %v908 = vld [vmem:[#allocation8 + $0x8] sm:$0xff]
        %v909 = vld [vmem:[#allocation8 + $0x10] sm:$0xff]
        %v910 = vld [vmem:[#allocation8 + $0x18] sm:$0xff]
        %v911 = vld [vmem:[#allocation8 + $0x20] sm:$0xff]
        %v912 = vld [vmem:[#allocation8 + $0x28] sm:$0xff]
        %v913 = vld [vmem:[#allocation8 + $0x30] sm:$0xff]
        %v914 = vld [vmem:[#allocation8 + $0x38] sm:$0xff]
        %v915 = vld [vmem:[#allocation8 + $0x40] sm:$0xff]
        %v916 = vld [vmem:[#allocation8 + $0x48] sm:$0xff]
        %v917 = vld [vmem:[#allocation8 + $0x50] sm:$0xff]
        %v918 = vld [vmem:[#allocation8 + $0x58] sm:$0xff]
        %v919 = vld [vmem:[#allocation8 + $0x60] sm:$0xff]
        %v920 = vld [vmem:[#allocation8 + $0x68] sm:$0xff]
        %v921 = vld [vmem:[#allocation8 + $0x70] sm:$0xff]
        %v922 = vld [vmem:[#allocation8 + $0x78] sm:$0xff]
        %v923 = vld [vmem:[%s6] sm:$0x1]
        %v925 = vlaneseq
        %v926 = vshrl.u32 %v925, 7
        %v927 = vsub.s32 0, %v926
        %v928 = vrot.slane %v923, %v927
        %930 = vmatprep.subr.mxu0 0.0
        %931 = vmatpush1.msra.mxu0 %v907
        %932 = vmatprep.subr.mxu0 0.0
        %933 = vmatpush1.msra.mxu0 %v908
        %934 = vmatprep.subr.mxu0 0.0
        %935 = vmatpush1.msra.mxu0 %v909
        %936 = vmatprep.subr.mxu0 0.0
        %937 = vmatpush1.msra.mxu0 %v910
        %938 = vmatprep.subr.mxu0 0.0
        %939 = vmatpush1.msra.mxu0 %v911
        %940 = vmatprep.subr.mxu0 0.0
        %941 = vmatpush1.msra.mxu0 %v912
        %942 = vmatprep.subr.mxu0 0.0
        %943 = vmatpush1.msra.mxu0 %v913
        %944 = vmatprep.subr.mxu0 0.0
        %945 = vmatpush1.msra.mxu0 %v914
        %946 = vmatprep.subr.mxu0 0.0
        %947 = vmatpush1.msra.mxu0 %v915
        %948 = vmatprep.subr.mxu0 0.0
        %949 = vmatpush1.msra.mxu0 %v916
        %950 = vmatprep.subr.mxu0 0.0
        %951 = vmatpush1.msra.mxu0 %v917
        %952 = vmatprep.subr.mxu0 0.0
        %953 = vmatpush1.msra.mxu0 %v918
        %954 = vmatprep.subr.mxu0 0.0
        %955 = vmatpush1.msra.mxu0 %v919
        %956 = vmatprep.subr.mxu0 0.0
        %957 = vmatpush1.msra.mxu0 %v920
        %958 = vmatprep.subr.mxu0 0.0
        %959 = vmatpush1.msra.mxu0 %v921
        %960 = vmatprep.subr.mxu0 0.0
        %961 = vmatpush1.msra.mxu0 %v922
        %962 = vmatprep.subr.mxu0 0.0
        %963 = vmatpush1.msra.mxu0 0.0
        %964 = vmatprep.subr.mxu0 0.0
        %965 = vmatpush1.msra.mxu0 0.0
        %966 = vmatprep.subr.mxu0 0.0
        %967 = vmatpush1.msra.mxu0 0.0
        %968 = vmatprep.subr.mxu0 0.0
        %969 = vmatpush1.msra.mxu0 0.0
        %970 = vmatprep.subr.mxu0 0.0
        %971 = vmatpush1.msra.mxu0 0.0
        %972 = vmatprep.subr.mxu0 0.0
        %973 = vmatpush1.msra.mxu0 0.0
        %974 = vmatprep.subr.mxu0 0.0
        %975 = vmatpush1.msra.mxu0 0.0
        %976 = vmatprep.subr.mxu0 0.0
        %977 = vmatpush1.msra.mxu0 0.0
        %978 = vmatprep.subr.mxu0 0.0
        %979 = vmatpush1.msra.mxu0 0.0
        %980 = vmatprep.subr.mxu0 0.0
        %981 = vmatpush1.msra.mxu0 0.0
        %982 = vmatprep.subr.mxu0 0.0
        %983 = vmatpush1.msra.mxu0 0.0
        %984 = vmatprep.subr.mxu0 0.0
        %985 = vmatpush1.msra.mxu0 0.0
        %986 = vmatprep.subr.mxu0 0.0
        %987 = vmatpush1.msra.mxu0 0.0
        %988 = vmatprep.subr.mxu0 0.0
        %989 = vmatpush1.msra.mxu0 0.0
        %990 = vmatprep.subr.mxu0 0.0
        %991 = vmatpush1.msra.mxu0 0.0
        %992 = vmatprep.subr.mxu0 0.0
        %993 = vmatpush1.msra.mxu0 0.0
        %994 = vmatprep.mubr.f32.mxu0 0.0
        %995 = vmatmul.mubr.f32.gmra.mrb[0].mxu0 %v906
        %v996 = vpop.f32.mrb[0].mxu0
        %v997 = vadd.f32 %v928, %v996
        %v998 = vpop.f32.mrb[0].mxu0
        %999 = vdwg.mxu0
        %v1000 = vmax.f32 %v997, 0.0
        %1001 = vst [vmem:[%s359] sm:$0xff] %v1000
        %1002 = vst [vmem:[%s366] sm:$0xff] %v723
        %s1003 = sand.u32 %s189, 1
        %s1004 = scalar_lea.sflag [#allocation4], %s1003
        %s1005 = sand.u32 %s189, 1
        %s1006 = smul.addr %s1005, 8
        %s1007 = scalar_lea.vmem [#allocation10], %s1006
        %s1008 = sand.u32 %s215, 1
        %s1009 = scalar_lea.sflag [#allocation12], %s1008
        %s1010 = sand.u32 %s215, 1
        %s1011 = smul.addr %s1010, 8
        %s1012 = scalar_lea.vmem [#allocation11], %s1011
        // Predicated region
        $region65: #{_deep_timestep_forward.1} parent=47 // pred_check
          %p1013 = pneg %p199
        $region66: #{_deep_timestep_forward.1} parent=47 // pred_check_branch
          %1015 = sbr.rel (%p1013) target = $region68
        $region67: #{_deep_timestep_forward.1} parent=47 // pred_region
          %s1017 = ssub.s32 128, 128
          %1018 = vsyncadd %s1004, %s1017
          %s1019 = smul.addr %s29, 128
          %s1020 = scalar_lea.hbm %s7, %s1019
          %s1022 = sshll.u32 %s1007, 4
          %s1023 = int_to_ptr.vmem [resolvable:$true] %s1022
          %1025 = dma.vmem_to_hbm [thread:$0]  %s1023, 128, %s1020, %s1004
        $region68: #{_deep_timestep_forward.1} parent=47 // pred_fallthru
          _
        // Predicated region
        $region69: #{_deep_timestep_forward.1} parent=47 // pred_check
          %p1026 = pneg %p225
        $region70: #{_deep_timestep_forward.1} parent=47 // pred_check_branch
          %1028 = sbr.rel (%p1026) target = $region72
        $region71: #{_deep_timestep_forward.1} parent=47 // pred_region
          %s1030 = ssub.s32 128, 128
          %1031 = vsyncadd %s1009, %s1030
          %s1032 = smul.addr %s29, 128
          %s1033 = scalar_lea.hbm %s8, %s1032
          %s1035 = sshll.u32 %s1012, 4
          %s1036 = int_to_ptr.vmem [resolvable:$true] %s1035
          %1038 = dma.vmem_to_hbm [thread:$0]  %s1036, 128, %s1033, %s1009
        $region72: #{_deep_timestep_forward.1} parent=47 // pred_fallthru
          _
      $region48: #{_deep_timestep_forward.1} parent=5 // pred_fallthru
        _
      %p1039 = scmp.le.s32.totalorder 2, %s24
      // Predicated region
      $region73: #{_deep_timestep_forward.1} parent=5 // pred_check
        %p1040 = pneg %p1039
      $region74: #{_deep_timestep_forward.1} parent=5 // pred_check_branch
        %1042 = sbr.rel (%p1040) target = $region76
      $region75: #{_deep_timestep_forward.1} parent=5 // pred_region
        %s1043 = ssub.s32 %s24, 2
        // Predicated region
        $region77: #{_deep_timestep_forward.1} parent=75 // pred_check
          %p1044 = pneg %p205
        $region78: #{_deep_timestep_forward.1} parent=75 // pred_check_branch
          %1046 = sbr.rel (%p1044) target = $region80
        $region79: #{_deep_timestep_forward.1} parent=75 // pred_region
          %s1047 = sand.u32 %s190, 1
          %s1048 = scalar_lea.sflag [#allocation4], %s1047
          %s1049 = sand.u32 %s190, 1
          %s1050 = smul.addr %s1049, 8
          %s1051 = scalar_lea.vmem [#allocation10], %s1050
          %1052 = dma.done %s1048, 128
        $region80: #{_deep_timestep_forward.1} parent=75 // pred_fallthru
          _
        // Predicated region
        $region81: #{_deep_timestep_forward.1} parent=75 // pred_check
          %p1053 = pneg %p231
        $region82: #{_deep_timestep_forward.1} parent=75 // pred_check_branch
          %1055 = sbr.rel (%p1053) target = $region84
        $region83: #{_deep_timestep_forward.1} parent=75 // pred_region
          %s1056 = sand.u32 %s216, 1
          %s1057 = scalar_lea.sflag [#allocation12], %s1056
          %s1058 = sand.u32 %s216, 1
          %s1059 = smul.addr %s1058, 8
          %s1060 = scalar_lea.vmem [#allocation11], %s1059
          %1061 = dma.done %s1057, 128
        $region84: #{_deep_timestep_forward.1} parent=75 // pred_fallthru
          _
      $region76: #{_deep_timestep_forward.1} parent=5 // pred_fallthru
        _
    $region6: #{_deep_timestep_forward.1} parent=1 // loop_footer
      %s28 = sadd.s32 1, %s24
    $region7: #{_deep_timestep_forward.1} parent=1 // loop_footer_branch
      %23 = sbr.rel target = $region3
    $region8: #{_deep_timestep_forward.1} parent=1 // loop_exit
      _
    %1062 = vsyncpa [#allocation3], 1
    %s1063 = scalar_lea.sflag [#allocation3], 1
    %1064 = vsyncpa %s1063, 1
    %1065 = vsyncpa [#allocation6], 1
    %1066 = vsyncpa [#allocation9], 1
    %1067 = vsyncpa [#allocation4], 1
    %s1068 = scalar_lea.sflag [#allocation4], 1
    %1069 = vsyncpa %s1068, 1
    %1070 = vsyncpa [#allocation12], 1
    %s1071 = scalar_lea.sflag [#allocation12], 1
    %1072 = vsyncpa %s1071, 1

</llo_original>
